<compile_context>
chip_gen: v6e
topology: v6e:2x2x1
jax: 0.10.0
libtpu: 0.0.40
codegen_flags: <defaults>
</compile_context>

<pallas_src>
import jax
import jax.numpy as jnp
from jax import lax
from jax.experimental import pallas as pl
from jax.experimental.pallas import tpu as pltpu

LN_EPS = 1e-5  # torch.nn.LayerNorm default


# ---------------------------------------------------------------------------
# Fused kernel (built per network configuration; layers unrolled at trace time)
# ---------------------------------------------------------------------------
def _normalize(x):
    """LayerNorm core (no affine). Single-pass stats: sum and sum-of-squares are
    independent reductions, so they pipeline on the XLU."""
    n = x.shape[-1]
    s = jnp.sum(x, axis=-1, keepdims=True)
    ss = jnp.sum(x * x, axis=-1, keepdims=True)
    mean = s * (1.0 / n)
    var = jnp.maximum(ss * (1.0 / n) - mean * mean, 0.0)
    return (x - mean) * lax.rsqrt(var + LN_EPS)


def _make_fused_kernel(num_layers, use_feature_norm):
    """Kernel ref order: x, (w_t, vec) * num_layers, out.
       w_t : (Din, Dout) pre-transposed weight (f32 or bf16)
       vec : (3, Dout) f32 packed vectors; row0 = bias, rows 1/2 = final-LN gamma/beta
             (only consumed for the last layer; dummy 1/0 otherwise)."""

    def kernel(*refs):
        x_ref, out_ref = refs[0], refs[-1]
        x = x_ref[...].astype(jnp.float32)
        if use_feature_norm:
            x = _normalize(x)  # feature-norm affine was folded into layer 0's W/b
        for l in range(num_layers):
            w_t = refs[1 + 2 * l][...]       # (Din, Dout)
            vec = refs[2 + 2 * l][...]       # (3, Dout) f32
            xin = x.astype(w_t.dtype) if w_t.dtype != jnp.float32 else x
            y = jnp.dot(xin, w_t, preferred_element_type=jnp.float32)
            y = jnp.maximum(y + vec[0:1, :], 0.0)          # bias + relu
            x = _normalize(y)
            if l == num_layers - 1:                         # only last LN keeps affine
                x = x * vec[1:2, :] + vec[2:3, :]
        out_ref[...] = x.astype(out_ref.dtype)

    return kernel


# ---------------------------------------------------------------------------
# Wrapper: single pallas_call for the whole MLP
# ---------------------------------------------------------------------------
def _round_up(v, m):
    return (v + m - 1) // m * m


def _pick_batch_tile(B, Din, Dout, hidden_max, param_bytes, vmem_budget=24 << 20):
    """Largest multiple-of-8 batch tile fitting the VMEM budget.
    Small batches collapse to one grid step; larger ones tile at up to 1024 rows."""
    # double-buffered input/output tiles + live activations per row
    per_row = 4 * (2 * Din + 2 * Dout + 6 * hidden_max)
    avail = max(vmem_budget - 2 * param_bytes, 1 << 20)
    cap = max(8, (avail // per_row) // 8 * 8)
    tb = int(min(_round_up(max(B, 1), 8), cap, 1024))
    bp = _round_up(max(B, 1), tb)
    return tb, bp


def mlp_base_forward(folded, x):
    """folded = fold_params(raw) output; x : (batch, obs_dim) float32."""
    use_fn = folded["use_feature_norm"]
    layers = folded["layers"]
    num_layers = len(layers)
    B, Din = x.shape
    dims = [Din] + [w_t.shape[1] for (w_t, _) in layers]
    Dout = dims[-1]
    hidden_max = max(dims[1:])

    param_bytes = int(sum(w.size * w.dtype.itemsize + v.size * v.dtype.itemsize
                          for (w, v) in layers))
    TB, Bp = _pick_batch_tile(B, Din, Dout, hidden_max, param_bytes)
    grid = (Bp // TB,)
    if Bp != B:
        x = jnp.pad(x, ((0, Bp - B), (0, 0)))  # padded rows are discarded after the call

    const = lambda i: (0, 0)  # params stay VMEM-resident across grid steps
    in_specs = [pl.BlockSpec((TB, Din), lambda i: (i, 0))]
    args = [x]
    for (w_t, vec) in layers:
        din, dout = w_t.shape
        # NOTE: for very large hidden sizes these constant-index specs could take
        # pipeline_mode=pl.Buffered(1) to avoid double-buffering the weights.
        in_specs.append(pl.BlockSpec((din, dout), const))
        in_specs.append(pl.BlockSpec((3, dout), const))
        args += [w_t, vec]

    # VMEM actually needed (params worst-case double-buffered + I/O tiles + activation
    # headroom), derived rather than hardcoded so it stays valid on v7x's 64 MiB VMEM.
    need = (2 * param_bytes
            + 2 * TB * Din * 4
            + 2 * TB * Dout * 4
            + 8 * TB * hidden_max * 4)
    vmem_limit = int(min(max(need * 2, 4 << 20), 64 << 20))

    flops = int(sum(2 * Bp * dims[k] * dims[k + 1] for k in range(num_layers)))
    transcendentals = int(Bp * (num_layers + int(use_fn)))  # one rsqrt per row per LN
    bytes_accessed = int(sum(a.size * a.dtype.itemsize for a in args) + Bp * Dout * 4)

    kernel = _make_fused_kernel(num_layers, use_fn)
    out = pl.pallas_call(
        kernel,
        out_shape=jax.ShapeDtypeStruct((Bp, Dout), x.dtype),
        grid=grid,
        in_specs=in_specs,
        out_specs=pl.BlockSpec((TB, Dout), lambda i: (i, 0)),
        compiler_params=pltpu.CompilerParams(
            # On v7x with >=2 tiles this axis could be pltpu.CORE_PARALLEL to shard the
            # batch across both TensorCores; "parallel" is safe on every generation.
            dimension_semantics=("parallel",),
            vmem_limit_bytes=vmem_limit,
        ),
        cost_estimate=pl.CostEstimate(
            flops=flops, transcendentals=transcendentals, bytes_accessed=bytes_accessed),
    )(*args)
    return out if Bp == B else out[:B]


# ---------------------------------------------------------------------------
# Parameter construction (raw torch-layout params) + one-time fold transform
# ---------------------------------------------------------------------------
def _orthogonal(key, rows, cols, gain):
    """Deterministic orthogonal init (nn.init.orthogonal_ with gain), torch (out, in)."""
    a = jax.random.normal(key, (max(rows, cols), min(rows, cols)), jnp.float32)
    q, r = jnp.linalg.qr(a)
    q = q * jnp.sign(jnp.diagonal(r))
    if rows < cols:
        q = q.T
    return gain * q[:rows, :cols]


def init_mlp_base_params(key, obs_dim, hidden_sizes, use_feature_normalization=True):
    """Raw params, torch layout: W (out, in); biases 0; LayerNorm weight=1, bias=0."""
    gain = float(jnp.sqrt(2.0))  # nn.init.calculate_gain('relu')
    params = {}
    if use_feature_normalization:
        params["feature_norm"] = (jnp.ones((obs_dim,), jnp.float32),
                                  jnp.zeros((obs_dim,), jnp.float32))
    dims = [obs_dim] + list(hidden_sizes)
    layers = []
    for i in range(len(hidden_sizes)):
        key, sub = jax.random.split(key)
        W = _orthogonal(sub, dims[i + 1], dims[i], gain)       # (out, in)
        b = jnp.zeros((dims[i + 1],), jnp.float32)             # nn.init.constant_(0)
        g = jnp.ones((dims[i + 1],), jnp.float32)              # LayerNorm weight
        beta = jnp.zeros((dims[i + 1],), jnp.float32)          # LayerNorm bias
        layers.append((W, b, g, beta))
    params["layers"] = layers
    return params


def fold_params(raw, use_bf16_matmul=False):
    """Pre-transpose weights and fold every LayerNorm affine (except the final one)
    into the following Linear layer.  One-time transform; forward math unchanged.
        x_prev = n * g_prev + beta_prev
        x_prev @ W^T + b = n @ (diag(g_prev) W^T) + (beta_prev @ W^T + b)
    """
    use_fn = "feature_norm" in raw
    layers = raw["layers"]
    n = len(layers)
    pg, pb = raw["feature_norm"] if use_fn else (None, None)
    folded = []
    for i, (W, b, g, beta) in enumerate(layers):
        w_t = jnp.asarray(W).T                         # (in, out)
        if pg is not None:
            b = b + pb @ w_t                           # beta_prev @ W^T (before scaling!)
            w_t = w_t * pg[:, None]                    # diag(gamma_prev) @ W^T
        if i == n - 1:
            vec = jnp.stack([b, g, beta]).astype(jnp.float32)  # final LN keeps affine
            pg = pb = None
        else:
            vec = jnp.stack([b, jnp.ones_like(b), jnp.zeros_like(b)]).astype(jnp.float32)
            pg, pb = g, beta                           # fold into the next layer
        if use_bf16_matmul:
            w_t = w_t.astype(jnp.bfloat16)
        folded.append((jnp.asarray(w_t), vec))
    return {"use_feature_norm": use_fn, "layers": folded}


# ---------------------------------------------------------------------------
# Reference (pure JAX, un-folded, un-fused) for sanity checking
# ---------------------------------------------------------------------------
def _ref_layernorm(x, g, b):
    m = jnp.mean(x, -1, keepdims=True)
    v = jnp.mean((x - m) ** 2, -1, keepdims=True)
    return (x - m) / jnp.sqrt(v + LN_EPS) * g + b


def _ref_forward(raw, x):
    if "feature_norm" in raw:
        g, b = raw["feature_norm"]
        x = _ref_layernorm(x, g, b)
    for (W, b, g, beta) in raw["layers"]:
        x = _ref_layernorm(jnp.maximum(x @ W.T + b, 0.0), g, beta)
    return x


def _check(raw, x, atol, rtol, use_bf16=False):
    folded = fold_params(raw, use_bf16_matmul=use_bf16)
    out = jax.block_until_ready(mlp_base_forward(folded, x))
    ref = _ref_forward(raw, x)
    assert out.shape == ref.shape, (out.shape, ref.shape)
    assert bool(jnp.allclose(out, ref, atol=atol, rtol=rtol)), "mismatch vs JAX reference"
    return out


if __name__ == "__main__":
    # args = {'use_feature_normalization': True, 'initialization_method': 'orthogonal_',
    #         'activation_func': 'relu', 'hidden_sizes': [...]}
    key = jax.random.PRNGKey(0)

    # Case 1: HARL-default-style config at small shapes (LN at torch default init).
    k1, k2, key = jax.random.split(key, 3)
    raw1 = init_mlp_base_params(k1, obs_dim=24, hidden_sizes=[128, 128],
                                use_feature_normalization=True)
    x1 = jax.random.normal(k2, (64, 24), jnp.float32)
    _check(raw1, x1, atol=1e-3, rtol=1e-3)

    # Case 2: non-trivial LayerNorm gamma/beta and biases (exercises the LN-folding
    # math) plus a batch that is not a multiple of the tile (exercises padding).
    k1, k2, k3, key = jax.random.split(key, 4)
    raw2 = init_mlp_base_params(k1, obs_dim=32, hidden_sizes=[64, 128],
                                use_feature_normalization=True)

    def _rnd(k, shape, scale=0.5, shift=1.0):
        return shift + scale * jax.random.normal(k, shape, jnp.float32)

    ks = jax.random.split(k2, 2 + 3 * len(raw2["layers"]))
    g_f, b_f = raw2["feature_norm"]
    raw2["feature_norm"] = (_rnd(ks[0], g_f.shape), _rnd(ks[1], b_f.shape, shift=0.0))
    new_layers = []
    for j, (W, b, g, beta) in enumerate(raw2["layers"]):
        new_layers.append((W,
                           _rnd(ks[2 + 3 * j], b.shape, shift=0.0),
                           _rnd(ks[3 + 3 * j], g.shape),
                           _rnd(ks[4 + 3 * j], beta.shape, shift=0.0)))
    raw2["layers"] = new_layers
    x2 = jax.random.normal(k3, (50, 32), jnp.float32)
    _check(raw2, x2, atol=1e-3, rtol=1e-3)

    # Case 3: bf16 weights on the MXU (f32 accumulation) — looser tolerance.
    _check(raw1, x1, atol=5e-2, rtol=5e-2, use_bf16=True)

    print("KERNEL_OK")
</pallas_src>

<mosaic_0001>
module attributes {stable_mosaic.version = 11 : i64} {
  func.func @kernel(%arg0: i32, %arg1: memref<64x24xf32, #tpu.memory_space<vmem>>, %arg2: memref<24x128xf32, #tpu.memory_space<vmem>>, %arg3: memref<3x128xf32, #tpu.memory_space<vmem>>, %arg4: memref<128x128xf32, #tpu.memory_space<vmem>>, %arg5: memref<3x128xf32, #tpu.memory_space<vmem>>, %arg6: memref<64x128xf32, #tpu.memory_space<vmem>>) attributes {dimension_semantics = [#tpu.dimension_semantics<parallel>], iteration_bounds = array<i64: 1>, scalar_prefetch = 0 : i64, scratch_operands = 0 : i64, tpu.core_type = #tpu.core_type<tc>, window_params = [{transform_indices = @transform_0, window_bounds = array<i64: 64, 24>}, {pipeline_mode = #tpu.pipeline_mode<synchronous>, transform_indices = @transform_1, window_bounds = array<i64: 24, 128>}, {pipeline_mode = #tpu.pipeline_mode<synchronous>, transform_indices = @transform_2, window_bounds = array<i64: 3, 128>}, {pipeline_mode = #tpu.pipeline_mode<synchronous>, transform_indices = @transform_3, window_bounds = array<i64: 128, 128>}, {pipeline_mode = #tpu.pipeline_mode<synchronous>, transform_indices = @transform_4, window_bounds = array<i64: 3, 128>}, {transform_indices = @transform_5, window_bounds = array<i64: 64, 128>}]} {
    %c0 = arith.constant 0 : index
    %c0_0 = arith.constant 0 : index
    %0 = vector.load %arg1[%c0, %c0_0] : memref<64x24xf32, #tpu.memory_space<vmem>>, vector<64x24xf32>
    %cst = arith.constant dense<0.000000e+00> : vector<64xf32>
    %1 = vector.multi_reduction <add>, %0, %cst [1] : vector<64x24xf32> to vector<64xf32>
    %2 = vector.shape_cast %1 : vector<64xf32> to vector<64x1xf32>
    %3 = arith.mulf %0, %0 : vector<64x24xf32>
    %cst_1 = arith.constant dense<0.000000e+00> : vector<64xf32>
    %4 = vector.multi_reduction <add>, %3, %cst_1 [1] : vector<64x24xf32> to vector<64xf32>
    %5 = vector.shape_cast %4 : vector<64xf32> to vector<64x1xf32>
    %cst_2 = arith.constant 0.0416666679 : f32
    %6 = vector.broadcast %cst_2 : f32 to vector<64x1xf32>
    %7 = arith.mulf %2, %6 : vector<64x1xf32>
    %cst_3 = arith.constant 0.0416666679 : f32
    %8 = vector.broadcast %cst_3 : f32 to vector<64x1xf32>
    %9 = arith.mulf %5, %8 : vector<64x1xf32>
    %10 = arith.mulf %7, %7 : vector<64x1xf32>
    %11 = arith.subf %9, %10 : vector<64x1xf32>
    %cst_4 = arith.constant 0.000000e+00 : f32
    %12 = vector.broadcast %cst_4 : f32 to vector<64x1xf32>
    %13 = arith.maximumf %11, %12 : vector<64x1xf32>
    %14 = vector.broadcast %7 : vector<64x1xf32> to vector<64x24xf32>
    %15 = arith.subf %0, %14 : vector<64x24xf32>
    %cst_5 = arith.constant 9.99999974E-6 : f32
    %16 = vector.broadcast %cst_5 : f32 to vector<64x1xf32>
    %17 = arith.addf %13, %16 : vector<64x1xf32>
    %18 = math.rsqrt %17 : vector<64x1xf32>
    %19 = vector.broadcast %18 : vector<64x1xf32> to vector<64x24xf32>
    %20 = arith.mulf %15, %19 : vector<64x24xf32>
    %c0_6 = arith.constant 0 : index
    %c0_7 = arith.constant 0 : index
    %21 = vector.load %arg2[%c0_6, %c0_7] : memref<24x128xf32, #tpu.memory_space<vmem>>, vector<24x128xf32>
    %c0_8 = arith.constant 0 : index
    %c0_9 = arith.constant 0 : index
    %22 = vector.load %arg3[%c0_8, %c0_9] : memref<3x128xf32, #tpu.memory_space<vmem>>, vector<3x128xf32>
    %cst_10 = arith.constant dense<0.000000e+00> : vector<64x128xf32>
    %23 = tpu.matmul %20, %21, %cst_10 {dimension_numbers = #tpu.dot_dimension_numbers<[1], [0], [0], [1], [0, 0, 1, 1], [], []>} : vector<64x24xf32>, vector<24x128xf32>, vector<64x128xf32> -> vector<64x128xf32>
    %24 = vector.extract_strided_slice %22 {offsets = [0, 0], sizes = [1, 128], strides = [1, 1]} : vector<3x128xf32> to vector<1x128xf32>
    %25 = vector.broadcast %24 : vector<1x128xf32> to vector<64x128xf32>
    %26 = arith.addf %23, %25 : vector<64x128xf32>
    %cst_11 = arith.constant 0.000000e+00 : f32
    %27 = vector.broadcast %cst_11 : f32 to vector<64x128xf32>
    %28 = arith.maximumf %26, %27 : vector<64x128xf32>
    %cst_12 = arith.constant dense<0.000000e+00> : vector<64xf32>
    %29 = vector.multi_reduction <add>, %28, %cst_12 [1] : vector<64x128xf32> to vector<64xf32>
    %30 = vector.shape_cast %29 : vector<64xf32> to vector<64x1xf32>
    %31 = arith.mulf %28, %28 : vector<64x128xf32>
    %cst_13 = arith.constant dense<0.000000e+00> : vector<64xf32>
    %32 = vector.multi_reduction <add>, %31, %cst_13 [1] : vector<64x128xf32> to vector<64xf32>
    %33 = vector.shape_cast %32 : vector<64xf32> to vector<64x1xf32>
    %cst_14 = arith.constant 7.812500e-03 : f32
    %34 = vector.broadcast %cst_14 : f32 to vector<64x1xf32>
    %35 = arith.mulf %30, %34 : vector<64x1xf32>
    %cst_15 = arith.constant 7.812500e-03 : f32
    %36 = vector.broadcast %cst_15 : f32 to vector<64x1xf32>
    %37 = arith.mulf %33, %36 : vector<64x1xf32>
    %38 = arith.mulf %35, %35 : vector<64x1xf32>
    %39 = arith.subf %37, %38 : vector<64x1xf32>
    %cst_16 = arith.constant 0.000000e+00 : f32
    %40 = vector.broadcast %cst_16 : f32 to vector<64x1xf32>
    %41 = arith.maximumf %39, %40 : vector<64x1xf32>
    %42 = vector.broadcast %35 : vector<64x1xf32> to vector<64x128xf32>
    %43 = arith.subf %28, %42 : vector<64x128xf32>
    %cst_17 = arith.constant 9.99999974E-6 : f32
    %44 = vector.broadcast %cst_17 : f32 to vector<64x1xf32>
    %45 = arith.addf %41, %44 : vector<64x1xf32>
    %46 = math.rsqrt %45 : vector<64x1xf32>
    %47 = vector.broadcast %46 : vector<64x1xf32> to vector<64x128xf32>
    %48 = arith.mulf %43, %47 : vector<64x128xf32>
    %c0_18 = arith.constant 0 : index
    %c0_19 = arith.constant 0 : index
    %49 = vector.load %arg4[%c0_18, %c0_19] : memref<128x128xf32, #tpu.memory_space<vmem>>, vector<128x128xf32>
    %c0_20 = arith.constant 0 : index
    %c0_21 = arith.constant 0 : index
    %50 = vector.load %arg5[%c0_20, %c0_21] : memref<3x128xf32, #tpu.memory_space<vmem>>, vector<3x128xf32>
    %cst_22 = arith.constant dense<0.000000e+00> : vector<64x128xf32>
    %51 = tpu.matmul %48, %49, %cst_22 {dimension_numbers = #tpu.dot_dimension_numbers<[1], [0], [0], [1], [0, 0, 1, 1], [], []>} : vector<64x128xf32>, vector<128x128xf32>, vector<64x128xf32> -> vector<64x128xf32>
    %52 = vector.extract_strided_slice %50 {offsets = [0, 0], sizes = [1, 128], strides = [1, 1]} : vector<3x128xf32> to vector<1x128xf32>
    %53 = vector.broadcast %52 : vector<1x128xf32> to vector<64x128xf32>
    %54 = arith.addf %51, %53 : vector<64x128xf32>
    %cst_23 = arith.constant 0.000000e+00 : f32
    %55 = vector.broadcast %cst_23 : f32 to vector<64x128xf32>
    %56 = arith.maximumf %54, %55 : vector<64x128xf32>
    %cst_24 = arith.constant dense<0.000000e+00> : vector<64xf32>
    %57 = vector.multi_reduction <add>, %56, %cst_24 [1] : vector<64x128xf32> to vector<64xf32>
    %58 = vector.shape_cast %57 : vector<64xf32> to vector<64x1xf32>
    %59 = arith.mulf %56, %56 : vector<64x128xf32>
    %cst_25 = arith.constant dense<0.000000e+00> : vector<64xf32>
    %60 = vector.multi_reduction <add>, %59, %cst_25 [1] : vector<64x128xf32> to vector<64xf32>
    %61 = vector.shape_cast %60 : vector<64xf32> to vector<64x1xf32>
    %cst_26 = arith.constant 7.812500e-03 : f32
    %62 = vector.broadcast %cst_26 : f32 to vector<64x1xf32>
    %63 = arith.mulf %58, %62 : vector<64x1xf32>
    %cst_27 = arith.constant 7.812500e-03 : f32
    %64 = vector.broadcast %cst_27 : f32 to vector<64x1xf32>
    %65 = arith.mulf %61, %64 : vector<64x1xf32>
    %66 = arith.mulf %63, %63 : vector<64x1xf32>
    %67 = arith.subf %65, %66 : vector<64x1xf32>
    %cst_28 = arith.constant 0.000000e+00 : f32
    %68 = vector.broadcast %cst_28 : f32 to vector<64x1xf32>
    %69 = arith.maximumf %67, %68 : vector<64x1xf32>
    %70 = vector.broadcast %63 : vector<64x1xf32> to vector<64x128xf32>
    %71 = arith.subf %56, %70 : vector<64x128xf32>
    %cst_29 = arith.constant 9.99999974E-6 : f32
    %72 = vector.broadcast %cst_29 : f32 to vector<64x1xf32>
    %73 = arith.addf %69, %72 : vector<64x1xf32>
    %74 = math.rsqrt %73 : vector<64x1xf32>
    %75 = vector.broadcast %74 : vector<64x1xf32> to vector<64x128xf32>
    %76 = arith.mulf %71, %75 : vector<64x128xf32>
    %77 = vector.extract_strided_slice %50 {offsets = [1, 0], sizes = [1, 128], strides = [1, 1]} : vector<3x128xf32> to vector<1x128xf32>
    %78 = vector.broadcast %77 : vector<1x128xf32> to vector<64x128xf32>
    %79 = arith.mulf %76, %78 : vector<64x128xf32>
    %80 = vector.extract_strided_slice %50 {offsets = [2, 0], sizes = [1, 128], strides = [1, 1]} : vector<3x128xf32> to vector<1x128xf32>
    %81 = vector.broadcast %80 : vector<1x128xf32> to vector<64x128xf32>
    %82 = arith.addf %79, %81 : vector<64x128xf32>
    %c0_30 = arith.constant 0 : index
    %c0_31 = arith.constant 0 : index
    %83 = vector.load %arg6[%c0_30, %c0_31] : memref<64x128xf32, #tpu.memory_space<vmem>>, vector<64x128xf32>
    tpu.vector_store %arg6[%c0_30, %c0_31], %82 {strides = array<i32>} : memref<64x128xf32, #tpu.memory_space<vmem>>, vector<64x128xf32>,
    return
  }
  func.func @transform_0(%arg0: i32) -> (i32, i32) {
    %c0_i32 = arith.constant 0 : i32
    %c0_i32_0 = arith.constant 0 : i32
    return %arg0, %c0_i32 : i32, i32
  }
  func.func @transform_1(%arg0: i32) -> (i32, i32) {
    %c0_i32 = arith.constant 0 : i32
    %c0_i32_0 = arith.constant 0 : i32
    %c0_i32_1 = arith.constant 0 : i32
    return %c0_i32, %c0_i32_0 : i32, i32
  }
  func.func @transform_2(%arg0: i32) -> (i32, i32) {
    %c0_i32 = arith.constant 0 : i32
    %c0_i32_0 = arith.constant 0 : i32
    %c0_i32_1 = arith.constant 0 : i32
    return %c0_i32, %c0_i32_0 : i32, i32
  }
  func.func @transform_3(%arg0: i32) -> (i32, i32) {
    %c0_i32 = arith.constant 0 : i32
    %c0_i32_0 = arith.constant 0 : i32
    %c0_i32_1 = arith.constant 0 : i32
    return %c0_i32, %c0_i32_0 : i32, i32
  }
  func.func @transform_4(%arg0: i32) -> (i32, i32) {
    %c0_i32 = arith.constant 0 : i32
    %c0_i32_0 = arith.constant 0 : i32
    %c0_i32_1 = arith.constant 0 : i32
    return %c0_i32, %c0_i32_0 : i32, i32
  }
  func.func @transform_5(%arg0: i32) -> (i32, i32) {
    %c0_i32 = arith.constant 0 : i32
    %c0_i32_0 = arith.constant 0 : i32
    return %arg0, %c0_i32 : i32, i32
  }
}

</mosaic_0001>

<llo_original>
// kernel: tpu_custom_call.1
$region0: #{tpu_custom_call.1}
  #allocation0 [shape = 'u32[]', space=smem, size = 0x4, offset = 0x4, fixed_abs, tag = 'smem constant byte address 0x4 - core index']
  #allocation1 [shape = 'u32[144,128]{1,0:T(1,128)}', space=vmem, size = 0x12000, scoped, tag = 'internal scratch']
  %s0 = inlined_call_operand.vmem [shape: f32[64,24], index: 0, kind: input, shape index: {}]
  %s1 = inlined_call_operand.vmem [shape: f32[24,128], index: 1, kind: input, shape index: {}]
  %s2 = inlined_call_operand.vmem [shape: f32[3,128], index: 2, kind: input, shape index: {}]
  %s3 = inlined_call_operand.hbm [shape: f32[128,128], index: 3, kind: input, shape index: {}]
  %s4 = inlined_call_operand.vmem [shape: f32[3,128], index: 4, kind: input, shape index: {}]
  %s5 = inlined_call_operand.hbm [shape: f32[64,128], index: 5, kind: output, shape index: {}]
  %s6 = sld [smem:[#allocation0]]
  $region34: #{tpu_custom_call.1} parent=0
    _
  %s8 = ssub.s32 1, %s6
  %s9 = scalar_select 0, %s8, %s6
  $region1: #{tpu_custom_call.1} parent=0
    #allocation2 [shape = 'u8[65536]{0}', space=vmem, size = 0x10000, scoped, tag = 'input window, operand 3, single buffered']
    #allocation3 [shape = 's32[1]{0}', space=sflag, size = 0x4, scoped, tag = 'scoped memory for tpu_custom_call.1']
    #allocation4 [shape = 's32[1]{0}', space=sflag, size = 0x4, scoped, tag = 'scoped memory for tpu_custom_call.1']
    #allocation5 [shape = 'u8[32768]{0}', space=vmem, size = 0x8000, scoped, tag = 'output window, operand 0, single buffered']
    %10 = vsyncpa [#allocation3], 0
    %11 = vsyncpa [#allocation4], 0
    // Predicated region
    $region2: #{tpu_custom_call.1} parent=1 // pred_check
      _
    $region3: #{tpu_custom_call.1} parent=1 // pred_check_branch
      %13 = sbr.rel (0) target = $region5
    $region4: #{tpu_custom_call.1} parent=1 // pred_region
      _
    $region5: #{tpu_custom_call.1} parent=1 // pred_fallthru
      _
    // Predicated region
    $region6: #{tpu_custom_call.1} parent=1 // pred_check
      _
    $region7: #{tpu_custom_call.1} parent=1 // pred_check_branch
      %15 = sbr.rel (0) target = $region9
    $region8: #{tpu_custom_call.1} parent=1 // pred_region
      _
    $region9: #{tpu_custom_call.1} parent=1 // pred_fallthru
      _
    // Predicated region
    $region10: #{tpu_custom_call.1} parent=1 // pred_check
      _
    $region11: #{tpu_custom_call.1} parent=1 // pred_check_branch
      %17 = sbr.rel (0) target = $region13
    $region12: #{tpu_custom_call.1} parent=1 // pred_region
      _
    $region13: #{tpu_custom_call.1} parent=1 // pred_fallthru
      _
    // Predicated region
    $region14: #{tpu_custom_call.1} parent=1 // pred_check
      _
    $region15: #{tpu_custom_call.1} parent=1 // pred_check_branch
      %19 = sbr.rel (0) target = $region17
    $region16: #{tpu_custom_call.1} parent=1 // pred_region
      %s21 = ssub.s32 2048, 2048
      %22 = vsyncadd [#allocation3], %s21
      %s23 = sshll.u32 [#allocation2], 4
      %s24 = int_to_ptr.vmem [resolvable:$true] %s23
      %29 = dma.hbm_to_vmem [thread:$0]  %s3, 2048, %s24, [#allocation3], 128, 128, 8
    $region17: #{tpu_custom_call.1} parent=1 // pred_fallthru
      _
    // Predicated region
    $region18: #{tpu_custom_call.1} parent=1 // pred_check
      _
    $region19: #{tpu_custom_call.1} parent=1 // pred_check_branch
      %31 = sbr.rel (0) target = $region21
    $region20: #{tpu_custom_call.1} parent=1 // pred_region
      _
    $region21: #{tpu_custom_call.1} parent=1 // pred_fallthru
      _
    // Predicated region
    $region22: #{tpu_custom_call.1} parent=1 // pred_check
      _
    $region23: #{tpu_custom_call.1} parent=1 // pred_check_branch
      %33 = sbr.rel (0) target = $region25
    $region24: #{tpu_custom_call.1} parent=1 // pred_region
      %34 = dma.done [#allocation3], 2048
    $region25: #{tpu_custom_call.1} parent=1 // pred_fallthru
      _
    %v35 = vld [vmem:[%s0] sm:$0xff]
    %v36 = vld [vmem:[%s0 + $0x8] sm:$0xff]
    %v37 = vld [vmem:[%s0 + $0x10] sm:$0xff]
    %v38 = vld [vmem:[%s0 + $0x18] sm:$0xff]
    %v39 = vld [vmem:[%s0 + $0x20] sm:$0xff]
    %v40 = vld [vmem:[%s0 + $0x28] sm:$0xff]
    %v41 = vld [vmem:[%s0 + $0x30] sm:$0xff]
    %v42 = vld [vmem:[%s0 + $0x38] sm:$0xff]
    %vm43 = vcmask 195584
    %v44 = vsel %vm43, %v35, 0.0
    %45 = vadd.xlane.f32.xlu0 %v44
    %v46 = vpop.xlane.xlu0 %45
    %v47 = vsel %vm43, %v36, 0.0
    %48 = vadd.xlane.f32.xlu0 %v47
    %v49 = vpop.xlane.xlu0 %48
    %v50 = vsel %vm43, %v37, 0.0
    %51 = vadd.xlane.f32.xlu0 %v50
    %v52 = vpop.xlane.xlu0 %51
    %v53 = vsel %vm43, %v38, 0.0
    %54 = vadd.xlane.f32.xlu0 %v53
    %v55 = vpop.xlane.xlu0 %54
    %v56 = vsel %vm43, %v39, 0.0
    %57 = vadd.xlane.f32.xlu0 %v56
    %v58 = vpop.xlane.xlu0 %57
    %v59 = vsel %vm43, %v40, 0.0
    %60 = vadd.xlane.f32.xlu0 %v59
    %v61 = vpop.xlane.xlu0 %60
    %v62 = vsel %vm43, %v41, 0.0
    %63 = vadd.xlane.f32.xlu0 %v62
    %v64 = vpop.xlane.xlu0 %63
    %v65 = vsel %vm43, %v42, 0.0
    %66 = vadd.xlane.f32.xlu0 %v65
    %v67 = vpop.xlane.xlu0 %66
    %v68 = vmul.f32 %v35, %v35
    %v69 = vmul.f32 %v36, %v36
    %v70 = vmul.f32 %v37, %v37
    %v71 = vmul.f32 %v38, %v38
    %v72 = vmul.f32 %v39, %v39
    %v73 = vmul.f32 %v40, %v40
    %v74 = vmul.f32 %v41, %v41
    %v75 = vmul.f32 %v42, %v42
    %v76 = vsel %vm43, %v68, 0.0
    %77 = vadd.xlane.f32.xlu0 %v76
    %v78 = vpop.xlane.xlu0 %77
    %v79 = vsel %vm43, %v69, 0.0
    %80 = vadd.xlane.f32.xlu0 %v79
    %v81 = vpop.xlane.xlu0 %80
    %v82 = vsel %vm43, %v70, 0.0
    %83 = vadd.xlane.f32.xlu0 %v82
    %v84 = vpop.xlane.xlu0 %83
    %v85 = vsel %vm43, %v71, 0.0
    %86 = vadd.xlane.f32.xlu0 %v85
    %v87 = vpop.xlane.xlu0 %86
    %v88 = vsel %vm43, %v72, 0.0
    %89 = vadd.xlane.f32.xlu0 %v88
    %v90 = vpop.xlane.xlu0 %89
    %v91 = vsel %vm43, %v73, 0.0
    %92 = vadd.xlane.f32.xlu0 %v91
    %v93 = vpop.xlane.xlu0 %92
    %v94 = vsel %vm43, %v74, 0.0
    %95 = vadd.xlane.f32.xlu0 %v94
    %v96 = vpop.xlane.xlu0 %95
    %v97 = vsel %vm43, %v75, 0.0
    %98 = vadd.xlane.f32.xlu0 %v97
    %v99 = vpop.xlane.xlu0 %98
    %v100 = vmul.f32 %v46, 0.041666668
    %v101 = vmul.f32 %v49, 0.041666668
    %v102 = vmul.f32 %v52, 0.041666668
    %v103 = vmul.f32 %v55, 0.041666668
    %v104 = vmul.f32 %v58, 0.041666668
    %v105 = vmul.f32 %v61, 0.041666668
    %v106 = vmul.f32 %v64, 0.041666668
    %v107 = vmul.f32 %v67, 0.041666668
    %v108 = vmul.f32 %v78, 0.041666668
    %v109 = vmul.f32 %v81, 0.041666668
    %v110 = vmul.f32 %v84, 0.041666668
    %v111 = vmul.f32 %v87, 0.041666668
    %v112 = vmul.f32 %v90, 0.041666668
    %v113 = vmul.f32 %v93, 0.041666668
    %v114 = vmul.f32 %v96, 0.041666668
    %v115 = vmul.f32 %v99, 0.041666668
    %v116 = vmul.f32 %v100, %v100
    %v117 = vmul.f32 %v101, %v101
    %v118 = vmul.f32 %v102, %v102
    %v119 = vmul.f32 %v103, %v103
    %v120 = vmul.f32 %v104, %v104
    %v121 = vmul.f32 %v105, %v105
    %v122 = vmul.f32 %v106, %v106
    %v123 = vmul.f32 %v107, %v107
    %v124 = vsub.f32 %v108, %v116
    %v125 = vsub.f32 %v109, %v117
    %v126 = vsub.f32 %v110, %v118
    %v127 = vsub.f32 %v111, %v119
    %v128 = vsub.f32 %v112, %v120
    %v129 = vsub.f32 %v113, %v121
    %v130 = vsub.f32 %v114, %v122
    %v131 = vsub.f32 %v115, %v123
    %v132 = vmax.f32 %v124, 0.0
    %v133 = vmax.f32 %v125, 0.0
    %v134 = vmax.f32 %v126, 0.0
    %v135 = vmax.f32 %v127, 0.0
    %v136 = vmax.f32 %v128, 0.0
    %v137 = vmax.f32 %v129, 0.0
    %v138 = vmax.f32 %v130, 0.0
    %v139 = vmax.f32 %v131, 0.0
    %v140 = vsub.f32 %v35, %v100
    %v141 = vsub.f32 %v36, %v101
    %v142 = vsub.f32 %v37, %v102
    %v143 = vsub.f32 %v38, %v103
    %v144 = vsub.f32 %v39, %v104
    %v145 = vsub.f32 %v40, %v105
    %v146 = vsub.f32 %v41, %v106
    %v147 = vsub.f32 %v42, %v107
    %v148 = vadd.f32 %v132, 1e-05
    %v149 = vadd.f32 %v133, 1e-05
    %v150 = vadd.f32 %v134, 1e-05
    %v151 = vadd.f32 %v135, 1e-05
    %v152 = vadd.f32 %v136, 1e-05
    %v153 = vadd.f32 %v137, 1e-05
    %v154 = vadd.f32 %v138, 1e-05
    %v155 = vadd.f32 %v139, 1e-05
    %v156 = vrsqrt.pop %v148
    %v157 = vrsqrt.pop %v149
    %v158 = vrsqrt.pop %v150
    %v159 = vrsqrt.pop %v151
    %v160 = vrsqrt.pop %v152
    %v161 = vrsqrt.pop %v153
    %v162 = vrsqrt.pop %v154
    %v163 = vrsqrt.pop %v155
    %v164 = vmul.f32 %v140, %v156
    %v165 = vmul.f32 %v141, %v157
    %v166 = vmul.f32 %v142, %v158
    %v167 = vmul.f32 %v143, %v159
    %v168 = vmul.f32 %v144, %v160
    %v169 = vmul.f32 %v145, %v161
    %v170 = vmul.f32 %v146, %v162
    %v171 = vmul.f32 %v147, %v163
    %v172 = vld [vmem:[%s1] sm:$0xff]
    %v173 = vld [vmem:[%s1 + $0x8] sm:$0xff]
    %v174 = vld [vmem:[%s1 + $0x10] sm:$0xff]
    %v175 = vld [vmem:[%s2] sm:$0x7]
    %v176 = vlaneseq
    %v177 = vshrl.u32 %v176, 7
    %v178 = vsub.s32 0, %v177
    %v179 = vrot.slane %v175, %v178
    %v181 = vsel %vm43, %v164, 0
    %v184 = vsel %vm43, %v165, 0
    %v187 = vsel %vm43, %v166, 0
    %v190 = vsel %vm43, %v167, 0
    %v193 = vsel %vm43, %v168, 0
    %v196 = vsel %vm43, %v169, 0
    %v199 = vsel %vm43, %v170, 0
    %v202 = vsel %vm43, %v171, 0
    %204 = vmatprep.subr.mxu0 0.0
    %205 = vmatpush1.msra.mxu0 0.0
    %206 = vmatprep.subr.mxu0 0.0
    %207 = vmatpush1.msra.mxu0 0.0
    %208 = vmatprep.subr.mxu0 0.0
    %209 = vmatpush1.msra.mxu0 0.0
    %210 = vmatprep.subr.mxu0 0.0
    %211 = vmatpush1.msra.mxu0 0.0
    %212 = vmatprep.subr.mxu0 0.0
    %213 = vmatpush1.msra.mxu0 0.0
    %214 = vmatprep.subr.mxu0 0.0
    %215 = vmatpush1.msra.mxu0 0.0
    %216 = vmatprep.subr.mxu0 0.0
    %217 = vmatpush1.msra.mxu0 0.0
    %218 = vmatprep.subr.mxu0 0.0
    %219 = vmatpush1.msra.mxu0 0.0
    %220 = vmatprep.subr.mxu0 0.0
    %221 = vmatpush1.msra.mxu0 0.0
    %222 = vmatprep.subr.mxu0 0.0
    %223 = vmatpush1.msra.mxu0 0.0
    %224 = vmatprep.subr.mxu0 0.0
    %225 = vmatpush1.msra.mxu0 0.0
    %226 = vmatprep.subr.mxu0 0.0
    %227 = vmatpush1.msra.mxu0 0.0
    %228 = vmatprep.subr.mxu0 0.0
    %229 = vmatpush1.msra.mxu0 0.0
    %230 = vmatprep.subr.mxu0 0.0
    %231 = vmatpush1.msra.mxu0 %v174
    %232 = vmatprep.subr.mxu0 0.0
    %233 = vmatpush1.msra.mxu0 %v173
    %234 = vmatprep.subr.mxu0 0.0
    %235 = vmatpush1.msra.mxu0 %v172
    %236 = vmatprep.subr.mxu0 0.0
    %237 = vmatpush2.msra.mxu0 0.0
    %238 = vmatprep.subr.mxu0 0.0
    %239 = vmatpush2.msra.mxu0 0.0
    %240 = vmatprep.subr.mxu0 0.0
    %241 = vmatpush2.msra.mxu0 0.0
    %242 = vmatprep.subr.mxu0 0.0
    %243 = vmatpush2.msra.mxu0 0.0
    %244 = vmatprep.subr.mxu0 0.0
    %245 = vmatpush2.msra.mxu0 0.0
    %246 = vmatprep.subr.mxu0 0.0
    %247 = vmatpush2.msra.mxu0 0.0
    %248 = vmatprep.subr.mxu0 0.0
    %249 = vmatpush2.msra.mxu0 0.0
    %250 = vmatprep.subr.mxu0 0.0
    %251 = vmatpush2.msra.mxu0 0.0
    %252 = vmatprep.subr.mxu0 0.0
    %253 = vmatpush2.msra.mxu0 0.0
    %254 = vmatprep.subr.mxu0 0.0
    %255 = vmatpush2.msra.mxu0 0.0
    %256 = vmatprep.subr.mxu0 0.0
    %257 = vmatpush2.msra.mxu0 0.0
    %258 = vmatprep.subr.mxu0 0.0
    %259 = vmatpush2.msra.mxu0 0.0
    %260 = vmatprep.subr.mxu0 0.0
    %261 = vmatpush2.msra.mxu0 0.0
    %262 = vmatprep.subr.mxu0 0.0
    %263 = vmatpush2.msra.mxu0 0.0
    %264 = vmatprep.subr.mxu0 0.0
    %265 = vmatpush2.msra.mxu0 0.0
    %266 = vmatprep.subr.mxu0 0.0
    %267 = vmatpush2.msra.mxu0 0.0
    %268 = vmatprep.mubr.f32.mxu0 0.0
    %269 = vmatmul.mubr.f32.gmra.mxu0 %v181
    %v270 = vpop.f32.mrf.mxu0
    %v271 = vadd.f32 %v179, %v270
    %v272 = vpop.f32.mrf.mxu0
    %273 = vmatprep.mubr.f32.mxu0 0.0
    %274 = vmatmul.mubr.f32.gmra.mxu0 %v184
    %v275 = vpop.f32.mrf.mxu0
    %v276 = vadd.f32 %v179, %v275
    %v277 = vpop.f32.mrf.mxu0
    %278 = vmatprep.mubr.f32.mxu0 0.0
    %279 = vmatmul.mubr.f32.gmra.mxu0 %v187
    %v280 = vpop.f32.mrf.mxu0
    %v281 = vadd.f32 %v179, %v280
    %v282 = vpop.f32.mrf.mxu0
    %283 = vmatprep.mubr.f32.mxu0 0.0
    %284 = vmatmul.mubr.f32.gmra.mxu0 %v190
    %v285 = vpop.f32.mrf.mxu0
    %v286 = vadd.f32 %v179, %v285
    %v287 = vpop.f32.mrf.mxu0
    %288 = vmatprep.mubr.f32.mxu0 0.0
    %289 = vmatmul.mubr.f32.gmra.mxu0 %v193
    %v290 = vpop.f32.mrf.mxu0
    %v291 = vadd.f32 %v179, %v290
    %v292 = vpop.f32.mrf.mxu0
    %293 = vmatprep.mubr.f32.mxu0 0.0
    %294 = vmatmul.mubr.f32.gmra.mxu0 %v196
    %v295 = vpop.f32.mrf.mxu0
    %v296 = vadd.f32 %v179, %v295
    %v297 = vpop.f32.mrf.mxu0
    %298 = vmatprep.mubr.f32.mxu0 0.0
    %299 = vmatmul.mubr.f32.gmra.mxu0 %v199
    %v300 = vpop.f32.mrf.mxu0
    %v301 = vadd.f32 %v179, %v300
    %v302 = vpop.f32.mrf.mxu0
    %303 = vmatprep.mubr.f32.mxu0 0.0
    %304 = vmatmul.mubr.f32.gmra.mxu0 %v202
    %v305 = vpop.f32.mrf.mxu0
    %v306 = vadd.f32 %v179, %v305
    %v307 = vpop.f32.mrf.mxu0
    %308 = vdwg.mxu0
    %v309 = vmax.f32 %v271, 0.0
    %v310 = vmax.f32 %v276, 0.0
    %v311 = vmax.f32 %v281, 0.0
    %v312 = vmax.f32 %v286, 0.0
    %v313 = vmax.f32 %v291, 0.0
    %v314 = vmax.f32 %v296, 0.0
    %v315 = vmax.f32 %v301, 0.0
    %v316 = vmax.f32 %v306, 0.0
    %317 = vadd.xlane.f32.xlu0 %v309
    %v318 = vpop.xlane.xlu0 %317
    %319 = vadd.xlane.f32.xlu0 %v310
    %v320 = vpop.xlane.xlu0 %319
    %321 = vadd.xlane.f32.xlu0 %v311
    %v322 = vpop.xlane.xlu0 %321
    %323 = vadd.xlane.f32.xlu0 %v312
    %v324 = vpop.xlane.xlu0 %323
    %325 = vadd.xlane.f32.xlu0 %v313
    %v326 = vpop.xlane.xlu0 %325
    %327 = vadd.xlane.f32.xlu0 %v314
    %v328 = vpop.xlane.xlu0 %327
    %329 = vadd.xlane.f32.xlu0 %v315
    %v330 = vpop.xlane.xlu0 %329
    %331 = vadd.xlane.f32.xlu0 %v316
    %v332 = vpop.xlane.xlu0 %331
    %v333 = vmul.f32 %v309, %v309
    %v334 = vmul.f32 %v310, %v310
    %v335 = vmul.f32 %v311, %v311
    %v336 = vmul.f32 %v312, %v312
    %v337 = vmul.f32 %v313, %v313
    %v338 = vmul.f32 %v314, %v314
    %v339 = vmul.f32 %v315, %v315
    %v340 = vmul.f32 %v316, %v316
    %341 = vadd.xlane.f32.xlu0 %v333
    %v342 = vpop.xlane.xlu0 %341
    %343 = vadd.xlane.f32.xlu0 %v334
    %v344 = vpop.xlane.xlu0 %343
    %345 = vadd.xlane.f32.xlu0 %v335
    %v346 = vpop.xlane.xlu0 %345
    %347 = vadd.xlane.f32.xlu0 %v336
    %v348 = vpop.xlane.xlu0 %347
    %349 = vadd.xlane.f32.xlu0 %v337
    %v350 = vpop.xlane.xlu0 %349
    %351 = vadd.xlane.f32.xlu0 %v338
    %v352 = vpop.xlane.xlu0 %351
    %353 = vadd.xlane.f32.xlu0 %v339
    %v354 = vpop.xlane.xlu0 %353
    %355 = vadd.xlane.f32.xlu0 %v340
    %v356 = vpop.xlane.xlu0 %355
    %v357 = vmul.f32 %v318, 0.0078125
    %v358 = vmul.f32 %v320, 0.0078125
    %v359 = vmul.f32 %v322, 0.0078125
    %v360 = vmul.f32 %v324, 0.0078125
    %v361 = vmul.f32 %v326, 0.0078125
    %v362 = vmul.f32 %v328, 0.0078125
    %v363 = vmul.f32 %v330, 0.0078125
    %v364 = vmul.f32 %v332, 0.0078125
    %v365 = vmul.f32 %v342, 0.0078125
    %v366 = vmul.f32 %v344, 0.0078125
    %v367 = vmul.f32 %v346, 0.0078125
    %v368 = vmul.f32 %v348, 0.0078125
    %v369 = vmul.f32 %v350, 0.0078125
    %v370 = vmul.f32 %v352, 0.0078125
    %v371 = vmul.f32 %v354, 0.0078125
    %v372 = vmul.f32 %v356, 0.0078125
    %v373 = vmul.f32 %v357, %v357
    %v374 = vmul.f32 %v358, %v358
    %v375 = vmul.f32 %v359, %v359
    %v376 = vmul.f32 %v360, %v360
    %v377 = vmul.f32 %v361, %v361
    %v378 = vmul.f32 %v362, %v362
    %v379 = vmul.f32 %v363, %v363
    %v380 = vmul.f32 %v364, %v364
    %v381 = vsub.f32 %v365, %v373
    %v382 = vsub.f32 %v366, %v374
    %v383 = vsub.f32 %v367, %v375
    %v384 = vsub.f32 %v368, %v376
    %v385 = vsub.f32 %v369, %v377
    %v386 = vsub.f32 %v370, %v378
    %v387 = vsub.f32 %v371, %v379
    %v388 = vsub.f32 %v372, %v380
    %v389 = vmax.f32 %v381, 0.0
    %v390 = vmax.f32 %v382, 0.0
    %v391 = vmax.f32 %v383, 0.0
    %v392 = vmax.f32 %v384, 0.0
    %v393 = vmax.f32 %v385, 0.0
    %v394 = vmax.f32 %v386, 0.0
    %v395 = vmax.f32 %v387, 0.0
    %v396 = vmax.f32 %v388, 0.0
    %v397 = vsub.f32 %v309, %v357
    %v398 = vsub.f32 %v310, %v358
    %v399 = vsub.f32 %v311, %v359
    %v400 = vsub.f32 %v312, %v360
    %v401 = vsub.f32 %v313, %v361
    %v402 = vsub.f32 %v314, %v362
    %v403 = vsub.f32 %v315, %v363
    %v404 = vsub.f32 %v316, %v364
    %v405 = vadd.f32 %v389, 1e-05
    %v406 = vadd.f32 %v390, 1e-05
    %v407 = vadd.f32 %v391, 1e-05
    %v408 = vadd.f32 %v392, 1e-05
    %v409 = vadd.f32 %v393, 1e-05
    %v410 = vadd.f32 %v394, 1e-05
    %v411 = vadd.f32 %v395, 1e-05
    %v412 = vadd.f32 %v396, 1e-05
    %v413 = vrsqrt.pop %v405
    %v414 = vrsqrt.pop %v406
    %v415 = vrsqrt.pop %v407
    %v416 = vrsqrt.pop %v408
    %v417 = vrsqrt.pop %v409
    %v418 = vrsqrt.pop %v410
    %v419 = vrsqrt.pop %v411
    %v420 = vrsqrt.pop %v412
    %v421 = vmul.f32 %v397, %v413
    %v422 = vmul.f32 %v398, %v414
    %v423 = vmul.f32 %v399, %v415
    %v424 = vmul.f32 %v400, %v416
    %v425 = vmul.f32 %v401, %v417
    %v426 = vmul.f32 %v402, %v418
    %v427 = vmul.f32 %v403, %v419
    %v428 = vmul.f32 %v404, %v420
    %v429 = vld [vmem:[#allocation2] sm:$0xff]
    %v430 = vld [vmem:[#allocation2 + $0x8] sm:$0xff]
    %v431 = vld [vmem:[#allocation2 + $0x10] sm:$0xff]
    %v432 = vld [vmem:[#allocation2 + $0x18] sm:$0xff]
    %v433 = vld [vmem:[#allocation2 + $0x20] sm:$0xff]
    %v434 = vld [vmem:[#allocation2 + $0x28] sm:$0xff]
    %v435 = vld [vmem:[#allocation2 + $0x30] sm:$0xff]
    %v436 = vld [vmem:[#allocation2 + $0x38] sm:$0xff]
    %v437 = vld [vmem:[#allocation2 + $0x40] sm:$0xff]
    %v438 = vld [vmem:[#allocation2 + $0x48] sm:$0xff]
    %v439 = vld [vmem:[#allocation2 + $0x50] sm:$0xff]
    %v440 = vld [vmem:[#allocation2 + $0x58] sm:$0xff]
    %v441 = vld [vmem:[#allocation2 + $0x60] sm:$0xff]
    %v442 = vld [vmem:[#allocation2 + $0x68] sm:$0xff]
    %v443 = vld [vmem:[#allocation2 + $0x70] sm:$0xff]
    %v444 = vld [vmem:[#allocation2 + $0x78] sm:$0xff]
    %v445 = vld [vmem:[%s4] sm:$0x7]
    %v446 = vlaneseq
    %v447 = vshrl.u32 %v446, 7
    %v448 = vsub.s32 0, %v447
    %v449 = vrot.slane %v445, %v448
    %450 = vmatprep.subr.mxu0 0.0
    %451 = vmatpush1.msra.mxu0 %v444
    %452 = vmatprep.subr.mxu0 0.0
    %453 = vmatpush1.msra.mxu0 %v443
    %454 = vmatprep.subr.mxu0 0.0
    %455 = vmatpush1.msra.mxu0 %v442
    %456 = vmatprep.subr.mxu0 0.0
    %457 = vmatpush1.msra.mxu0 %v441
    %458 = vmatprep.subr.mxu0 0.0
    %459 = vmatpush1.msra.mxu0 %v440
    %460 = vmatprep.subr.mxu0 0.0
    %461 = vmatpush1.msra.mxu0 %v439
    %462 = vmatprep.subr.mxu0 0.0
    %463 = vmatpush1.msra.mxu0 %v438
    %464 = vmatprep.subr.mxu0 0.0
    %465 = vmatpush1.msra.mxu0 %v437
    %466 = vmatprep.subr.mxu0 0.0
    %467 = vmatpush1.msra.mxu0 %v436
    %468 = vmatprep.subr.mxu0 0.0
    %469 = vmatpush1.msra.mxu0 %v435
    %470 = vmatprep.subr.mxu0 0.0
    %471 = vmatpush1.msra.mxu0 %v434
    %472 = vmatprep.subr.mxu0 0.0
    %473 = vmatpush1.msra.mxu0 %v433
    %474 = vmatprep.subr.mxu0 0.0
    %475 = vmatpush1.msra.mxu0 %v432
    %476 = vmatprep.subr.mxu0 0.0
    %477 = vmatpush1.msra.mxu0 %v431
    %478 = vmatprep.subr.mxu0 0.0
    %479 = vmatpush1.msra.mxu0 %v430
    %480 = vmatprep.subr.mxu0 0.0
    %481 = vmatpush1.msra.mxu0 %v429
    %482 = vmatprep.subr.mxu0 0.0
    %483 = vmatpush2.msra.mxu0 0.0
    %484 = vmatprep.subr.mxu0 0.0
    %485 = vmatpush2.msra.mxu0 0.0
    %486 = vmatprep.subr.mxu0 0.0
    %487 = vmatpush2.msra.mxu0 0.0
    %488 = vmatprep.subr.mxu0 0.0
    %489 = vmatpush2.msra.mxu0 0.0
    %490 = vmatprep.subr.mxu0 0.0
    %491 = vmatpush2.msra.mxu0 0.0
    %492 = vmatprep.subr.mxu0 0.0
    %493 = vmatpush2.msra.mxu0 0.0
    %494 = vmatprep.subr.mxu0 0.0
    %495 = vmatpush2.msra.mxu0 0.0
    %496 = vmatprep.subr.mxu0 0.0
    %497 = vmatpush2.msra.mxu0 0.0
    %498 = vmatprep.subr.mxu0 0.0
    %499 = vmatpush2.msra.mxu0 0.0
    %500 = vmatprep.subr.mxu0 0.0
    %501 = vmatpush2.msra.mxu0 0.0
    %502 = vmatprep.subr.mxu0 0.0
    %503 = vmatpush2.msra.mxu0 0.0
    %504 = vmatprep.subr.mxu0 0.0
    %505 = vmatpush2.msra.mxu0 0.0
    %506 = vmatprep.subr.mxu0 0.0
    %507 = vmatpush2.msra.mxu0 0.0
    %508 = vmatprep.subr.mxu0 0.0
    %509 = vmatpush2.msra.mxu0 0.0
    %510 = vmatprep.subr.mxu0 0.0
    %511 = vmatpush2.msra.mxu0 0.0
    %512 = vmatprep.subr.mxu0 0.0
    %513 = vmatpush2.msra.mxu0 0.0
    %514 = vmatprep.mubr.f32.mxu0 0.0
    %515 = vmatmul.mubr.f32.gmra.mxu0 %v421
    %v516 = vpop.f32.mrf.mxu0
    %v517 = vadd.f32 %v449, %v516
    %v518 = vpop.f32.mrf.mxu0
    %519 = vmatprep.mubr.f32.mxu0 0.0
    %520 = vmatmul.mubr.f32.gmra.mxu0 %v422
    %v521 = vpop.f32.mrf.mxu0
    %v522 = vadd.f32 %v449, %v521
    %v523 = vpop.f32.mrf.mxu0
    %524 = vmatprep.mubr.f32.mxu0 0.0
    %525 = vmatmul.mubr.f32.gmra.mxu0 %v423
    %v526 = vpop.f32.mrf.mxu0
    %v527 = vadd.f32 %v449, %v526
    %v528 = vpop.f32.mrf.mxu0
    %529 = vmatprep.mubr.f32.mxu0 0.0
    %530 = vmatmul.mubr.f32.gmra.mxu0 %v424
    %v531 = vpop.f32.mrf.mxu0
    %v532 = vadd.f32 %v449, %v531
    %v533 = vpop.f32.mrf.mxu0
    %534 = vmatprep.mubr.f32.mxu0 0.0
    %535 = vmatmul.mubr.f32.gmra.mxu0 %v425
    %v536 = vpop.f32.mrf.mxu0
    %v537 = vadd.f32 %v449, %v536
    %v538 = vpop.f32.mrf.mxu0
    %539 = vmatprep.mubr.f32.mxu0 0.0
    %540 = vmatmul.mubr.f32.gmra.mxu0 %v426
    %v541 = vpop.f32.mrf.mxu0
    %v542 = vadd.f32 %v449, %v541
    %v543 = vpop.f32.mrf.mxu0
    %544 = vmatprep.mubr.f32.mxu0 0.0
    %545 = vmatmul.mubr.f32.gmra.mxu0 %v427
    %v546 = vpop.f32.mrf.mxu0
    %v547 = vadd.f32 %v449, %v546
    %v548 = vpop.f32.mrf.mxu0
    %549 = vmatprep.mubr.f32.mxu0 0.0
    %550 = vmatmul.mubr.f32.gmra.mxu0 %v428
    %v551 = vpop.f32.mrf.mxu0
    %v552 = vadd.f32 %v449, %v551
    %v553 = vpop.f32.mrf.mxu0
    %554 = vdwg.mxu0
    %v555 = vmax.f32 %v517, 0.0
    %v556 = vmax.f32 %v522, 0.0
    %v557 = vmax.f32 %v527, 0.0
    %v558 = vmax.f32 %v532, 0.0
    %v559 = vmax.f32 %v537, 0.0
    %v560 = vmax.f32 %v542, 0.0
    %v561 = vmax.f32 %v547, 0.0
    %v562 = vmax.f32 %v552, 0.0
    %563 = vadd.xlane.f32.xlu0 %v555
    %v564 = vpop.xlane.xlu0 %563
    %565 = vadd.xlane.f32.xlu0 %v556
    %v566 = vpop.xlane.xlu0 %565
    %567 = vadd.xlane.f32.xlu0 %v557
    %v568 = vpop.xlane.xlu0 %567
    %569 = vadd.xlane.f32.xlu0 %v558
    %v570 = vpop.xlane.xlu0 %569
    %571 = vadd.xlane.f32.xlu0 %v559
    %v572 = vpop.xlane.xlu0 %571
    %573 = vadd.xlane.f32.xlu0 %v560
    %v574 = vpop.xlane.xlu0 %573
    %575 = vadd.xlane.f32.xlu0 %v561
    %v576 = vpop.xlane.xlu0 %575
    %577 = vadd.xlane.f32.xlu0 %v562
    %v578 = vpop.xlane.xlu0 %577
    %v579 = vmul.f32 %v555, %v555
    %v580 = vmul.f32 %v556, %v556
    %v581 = vmul.f32 %v557, %v557
    %v582 = vmul.f32 %v558, %v558
    %v583 = vmul.f32 %v559, %v559
    %v584 = vmul.f32 %v560, %v560
    %v585 = vmul.f32 %v561, %v561
    %v586 = vmul.f32 %v562, %v562
    %587 = vadd.xlane.f32.xlu0 %v579
    %v588 = vpop.xlane.xlu0 %587
    %589 = vadd.xlane.f32.xlu0 %v580
    %v590 = vpop.xlane.xlu0 %589
    %591 = vadd.xlane.f32.xlu0 %v581
    %v592 = vpop.xlane.xlu0 %591
    %593 = vadd.xlane.f32.xlu0 %v582
    %v594 = vpop.xlane.xlu0 %593
    %595 = vadd.xlane.f32.xlu0 %v583
    %v596 = vpop.xlane.xlu0 %595
    %597 = vadd.xlane.f32.xlu0 %v584
    %v598 = vpop.xlane.xlu0 %597
    %599 = vadd.xlane.f32.xlu0 %v585
    %v600 = vpop.xlane.xlu0 %599
    %601 = vadd.xlane.f32.xlu0 %v586
    %v602 = vpop.xlane.xlu0 %601
    %v603 = vmul.f32 %v564, 0.0078125
    %v604 = vmul.f32 %v566, 0.0078125
    %v605 = vmul.f32 %v568, 0.0078125
    %v606 = vmul.f32 %v570, 0.0078125
    %v607 = vmul.f32 %v572, 0.0078125
    %v608 = vmul.f32 %v574, 0.0078125
    %v609 = vmul.f32 %v576, 0.0078125
    %v610 = vmul.f32 %v578, 0.0078125
    %v611 = vmul.f32 %v588, 0.0078125
    %v612 = vmul.f32 %v590, 0.0078125
    %v613 = vmul.f32 %v592, 0.0078125
    %v614 = vmul.f32 %v594, 0.0078125
    %v615 = vmul.f32 %v596, 0.0078125
    %v616 = vmul.f32 %v598, 0.0078125
    %v617 = vmul.f32 %v600, 0.0078125
    %v618 = vmul.f32 %v602, 0.0078125
    %v619 = vmul.f32 %v603, %v603
    %v620 = vmul.f32 %v604, %v604
    %v621 = vmul.f32 %v605, %v605
    %v622 = vmul.f32 %v606, %v606
    %v623 = vmul.f32 %v607, %v607
    %v624 = vmul.f32 %v608, %v608
    %v625 = vmul.f32 %v609, %v609
    %v626 = vmul.f32 %v610, %v610
    %v627 = vsub.f32 %v611, %v619
    %v628 = vsub.f32 %v612, %v620
    %v629 = vsub.f32 %v613, %v621
    %v630 = vsub.f32 %v614, %v622
    %v631 = vsub.f32 %v615, %v623
    %v632 = vsub.f32 %v616, %v624
    %v633 = vsub.f32 %v617, %v625
    %v634 = vsub.f32 %v618, %v626
    %v635 = vmax.f32 %v627, 0.0
    %v636 = vmax.f32 %v628, 0.0
    %v637 = vmax.f32 %v629, 0.0
    %v638 = vmax.f32 %v630, 0.0
    %v639 = vmax.f32 %v631, 0.0
    %v640 = vmax.f32 %v632, 0.0
    %v641 = vmax.f32 %v633, 0.0
    %v642 = vmax.f32 %v634, 0.0
    %v643 = vsub.f32 %v555, %v603
    %v644 = vsub.f32 %v556, %v604
    %v645 = vsub.f32 %v557, %v605
    %v646 = vsub.f32 %v558, %v606
    %v647 = vsub.f32 %v559, %v607
    %v648 = vsub.f32 %v560, %v608
    %v649 = vsub.f32 %v561, %v609
    %v650 = vsub.f32 %v562, %v610
    %v651 = vadd.f32 %v635, 1e-05
    %v652 = vadd.f32 %v636, 1e-05
    %v653 = vadd.f32 %v637, 1e-05
    %v654 = vadd.f32 %v638, 1e-05
    %v655 = vadd.f32 %v639, 1e-05
    %v656 = vadd.f32 %v640, 1e-05
    %v657 = vadd.f32 %v641, 1e-05
    %v658 = vadd.f32 %v642, 1e-05
    %v659 = vrsqrt.pop %v651
    %v660 = vrsqrt.pop %v652
    %v661 = vrsqrt.pop %v653
    %v662 = vrsqrt.pop %v654
    %v663 = vrsqrt.pop %v655
    %v664 = vrsqrt.pop %v656
    %v665 = vrsqrt.pop %v657
    %v666 = vrsqrt.pop %v658
    %v667 = vmul.f32 %v643, %v659
    %v668 = vmul.f32 %v644, %v660
    %v669 = vmul.f32 %v645, %v661
    %v670 = vmul.f32 %v646, %v662
    %v671 = vmul.f32 %v647, %v663
    %v672 = vmul.f32 %v648, %v664
    %v673 = vmul.f32 %v649, %v665
    %v674 = vmul.f32 %v650, %v666
    %v675 = vlaneseq
    %v676 = vshrl.u32 %v675, 7
    %v677 = vsub.s32 1, %v676
    %v678 = vrot.slane %v445, %v677
    %v679 = vmul.f32 %v667, %v678
    %v680 = vmul.f32 %v668, %v678
    %v681 = vmul.f32 %v669, %v678
    %v682 = vmul.f32 %v670, %v678
    %v683 = vmul.f32 %v671, %v678
    %v684 = vmul.f32 %v672, %v678
    %v685 = vmul.f32 %v673, %v678
    %v686 = vmul.f32 %v674, %v678
    %v687 = vlaneseq
    %v688 = vshrl.u32 %v687, 7
    %v689 = vsub.s32 2, %v688
    %v690 = vrot.slane %v445, %v689
    %v691 = vadd.f32 %v679, %v690
    %v692 = vadd.f32 %v680, %v690
    %v693 = vadd.f32 %v681, %v690
    %v694 = vadd.f32 %v682, %v690
    %v695 = vadd.f32 %v683, %v690
    %v696 = vadd.f32 %v684, %v690
    %v697 = vadd.f32 %v685, %v690
    %v698 = vadd.f32 %v686, %v690
    %699 = vst [vmem:[#allocation5] sm:$0xff] %v691
    %700 = vst [vmem:[#allocation5 + $0x8] sm:$0xff] %v692
    %701 = vst [vmem:[#allocation5 + $0x10] sm:$0xff] %v693
    %702 = vst [vmem:[#allocation5 + $0x18] sm:$0xff] %v694
    %703 = vst [vmem:[#allocation5 + $0x20] sm:$0xff] %v695
    %704 = vst [vmem:[#allocation5 + $0x28] sm:$0xff] %v696
    %705 = vst [vmem:[#allocation5 + $0x30] sm:$0xff] %v697
    %706 = vst [vmem:[#allocation5 + $0x38] sm:$0xff] %v698
    // Predicated region
    $region26: #{tpu_custom_call.1} parent=1 // pred_check
      _
    $region27: #{tpu_custom_call.1} parent=1 // pred_check_branch
      %708 = sbr.rel (0) target = $region29
    $region28: #{tpu_custom_call.1} parent=1 // pred_region
      %s710 = ssub.s32 1024, 1024
      %711 = vsyncadd [#allocation4], %s710
      %s712 = sshll.u32 [#allocation5], 4
      %s713 = int_to_ptr.vmem [resolvable:$true] %s712
      %718 = dma.vmem_to_hbm [thread:$0]  %s713, 1024, %s5, [#allocation4], 128, 128, 8
    $region29: #{tpu_custom_call.1} parent=1 // pred_fallthru
      _
    // Predicated region
    $region30: #{tpu_custom_call.1} parent=1 // pred_check
      _
    $region31: #{tpu_custom_call.1} parent=1 // pred_check_branch
      %720 = sbr.rel (0) target = $region33
    $region32: #{tpu_custom_call.1} parent=1 // pred_region
      %721 = dma.done [#allocation4], 1024
    $region33: #{tpu_custom_call.1} parent=1 // pred_fallthru
      _
    %722 = vsyncpa [#allocation3], 1
    %723 = vsyncpa [#allocation4], 1

</llo_original>
